<compile_context>
chip_gen: v5e
topology: v5e:2x2
jax: 0.10.0
libtpu: 0.0.40
codegen_flags: <defaults>
</compile_context>

<pallas_src>
import functools

import jax
import jax.numpy as jnp
from jax.experimental import pallas as pl
from jax.experimental.pallas import tpu as pltpu


def _round_up(x, m):
    return ((x + m - 1) // m) * m


def mlp_kernel(idx_ref,                      # SMEM, (B_pad,) int32  (scalar prefetch)
               emb_ref,                      # VMEM, (n, nn) f32
               w1_ref, b1_ref,               # VMEM, (nn, nn) bf16, (1, nn) f32
               w2_ref, b2_ref,               # VMEM, (nn, nn) bf16, (1, nn) f32
               w3_ref, b3_ref,               # VMEM, (nn, n_pad) bf16, (1, n_pad) f32
               out_ref,                      # VMEM, (TB, n_pad) f32
               h_scratch):                   # VMEM scratch, (TB, nn) f32
    tb = out_ref.shape[0]
    base = pl.program_id(0) * tb

    # ---- Embedding gather: one dynamic row load per token (ids live in SMEM).
    @pl.loop(0, tb)
    def _(r):
        tok = idx_ref[base + r]
        h_scratch[pl.ds(r, 1), :] = emb_ref[pl.ds(tok, 1), :]

    # ---- Dropout(0.5) in eval mode == identity.

    h = h_scratch[...]                                            # (TB, nn) f32

    # ---- Hidden layer 1 (bf16 MXU, fp32 accumulate / elementwise).
    h = jnp.dot(h.astype(jnp.bfloat16), w1_ref[...],
                preferred_element_type=jnp.float32) + b1_ref[...]
    h = jnp.maximum(h, 0.0)

    # ---- Hidden layer 2.
    h = jnp.dot(h.astype(jnp.bfloat16), w2_ref[...],
                preferred_element_type=jnp.float32) + b2_ref[...]
    h = jnp.maximum(h, 0.0)

    # ---- Output projection -> padded logits (lane-dense store).
    out_ref[...] = (jnp.dot(h.astype(jnp.bfloat16), w3_ref[...],
                            preferred_element_type=jnp.float32) + b3_ref[...])


def mlp_forward(idx, params, *, block_b=256):
    """idx: (B,) int32 token ids in [0, n).  Returns logits (B, n) float32."""
    emb, w1, b1, w2, b2, w3, b3 = params
    n, nn_size = emb.shape
    n_pad = w3.shape[1]

    B = idx.shape[0]
    tb = min(block_b, _round_up(B, 8))
    b_pad = _round_up(B, tb)
    num_tiles = b_pad // tb

    idx_pad = jnp.zeros((b_pad,), jnp.int32).at[:B].set(idx.astype(jnp.int32))

    whole = lambda shape: pl.BlockSpec(shape, lambda i, idx_ref: (0, 0))

    grid_spec = pltpu.PrefetchScalarGridSpec(
        num_scalar_prefetch=1,
        grid=(num_tiles,),
        in_specs=[
            whole((n, nn_size)),          # emb (fp32, gathered by row)
            whole((nn_size, nn_size)),    # w1 (bf16)
            whole((1, nn_size)),          # b1
            whole((nn_size, nn_size)),    # w2 (bf16)
            whole((1, nn_size)),          # b2
            whole((nn_size, n_pad)),      # w3 (bf16, padded)
            whole((1, n_pad)),            # b3 (padded)
        ],
        out_specs=pl.BlockSpec((tb, n_pad), lambda i, idx_ref: (i, 0)),
        scratch_shapes=[pltpu.VMEM((tb, nn_size), jnp.float32)],
    )

    flops = 2 * b_pad * nn_size * (nn_size + nn_size + n_pad)
    bytes_accessed = (emb.size * 4 + (w1.size + w2.size + w3.size) * 2
                      + (b1.size + b2.size + b3.size) * 4
                      + b_pad * 4 + b_pad * n_pad * 4)

    out = pl.pallas_call(
        mlp_kernel,
        out_shape=jax.ShapeDtypeStruct((b_pad, n_pad), jnp.float32),
        grid_spec=grid_spec,
        compiler_params=pltpu.CompilerParams(
            dimension_semantics=("parallel",),
            vmem_limit_bytes=32 * 1024 * 1024,
        ),
        cost_estimate=pl.CostEstimate(
            flops=flops, transcendentals=0, bytes_accessed=bytes_accessed),
    )(idx_pad, emb, w1, b1, w2, b2, w3, b3)

    return out[:B, :n]


def init_params(key, n, nn_size):
    """Synthetic parameters matching the PyTorch module's shapes.

    Linear weights are stored pre-transposed as (in, out) == PyTorch weight.T,
    cast to bf16 for the MXU.  w3 / b3 are zero-padded on the logits dim up to
    a multiple of 128 so output stores are lane-dense; padding is numerically
    inert and sliced away in the wrapper.
    """
    n_pad = _round_up(n, 128)
    ks = jax.random.split(key, 7)
    emb = jax.random.normal(ks[0], (n, nn_size), jnp.float32) * 0.1   # fp32 (gather src)
    w1 = (jax.random.normal(ks[1], (nn_size, nn_size), jnp.float32) * 0.1
          ).astype(jnp.bfloat16)
    b1 = jax.random.normal(ks[2], (1, nn_size), jnp.float32) * 0.01
    w2 = (jax.random.normal(ks[3], (nn_size, nn_size), jnp.float32) * 0.1
          ).astype(jnp.bfloat16)
    b2 = jax.random.normal(ks[4], (1, nn_size), jnp.float32) * 0.01
    w3 = jnp.zeros((nn_size, n_pad), jnp.float32).at[:, :n].set(
        jax.random.normal(ks[5], (nn_size, n), jnp.float32) * 0.1
    ).astype(jnp.bfloat16)
    b3 = jnp.zeros((1, n_pad), jnp.float32).at[:, :n].set(
        jax.random.normal(ks[6], (1, n), jnp.float32) * 0.01)
    return emb, w1, b1, w2, b2, w3, b3


def mlp_reference(idx, params):
    """Pure-JAX reference of the eval-mode forward pass (same dtypes as kernel)."""
    emb, w1, b1, w2, b2, w3, b3 = params
    h = emb[idx]                                                   # (B, nn) f32
    h = jnp.dot(h.astype(jnp.bfloat16), w1,
                preferred_element_type=jnp.float32) + b1
    h = jnp.maximum(h, 0.0)
    h = jnp.dot(h.astype(jnp.bfloat16), w2,
                preferred_element_type=jnp.float32) + b2
    h = jnp.maximum(h, 0.0)
    return jnp.dot(h.astype(jnp.bfloat16), w3,
                   preferred_element_type=jnp.float32) + b3        # (B, n_pad)


if __name__ == "__main__":
    n = 16          # vocab size / output logits dim
    nn_size = 32    # hidden width
    batch = 8

    key = jax.random.PRNGKey(0)
    k_idx, k_params = jax.random.split(key)
    params = init_params(k_params, n, nn_size)
    idx = jax.random.randint(k_idx, (batch,), 0, n, dtype=jnp.int32)

    logits = mlp_forward(idx, params)
    logits = jax.block_until_ready(logits)

    ref = mlp_reference(idx, params)[:, :n]
    assert logits.shape == (batch, n)
    assert jnp.allclose(logits, ref, atol=1e-3, rtol=1e-3), "mismatch vs reference"

    print("KERNEL_OK")
</pallas_src>

<mosaic_0001>
module attributes {stable_mosaic.version = 11 : i64} {
  func.func @mlp_kernel(%arg0: i32, %arg1: memref<8xi32, #tpu.memory_space<smem>>, %arg2: memref<16x32xf32, #tpu.memory_space<vmem>>, %arg3: memref<32x32xbf16, #tpu.memory_space<vmem>>, %arg4: memref<1x32xf32, #tpu.memory_space<vmem>>, %arg5: memref<32x32xbf16, #tpu.memory_space<vmem>>, %arg6: memref<1x32xf32, #tpu.memory_space<vmem>>, %arg7: memref<32x128xbf16, #tpu.memory_space<vmem>>, %arg8: memref<1x128xf32, #tpu.memory_space<vmem>>, %arg9: memref<8x128xf32, #tpu.memory_space<vmem>>, %arg10: memref<8x32xf32, #tpu.memory_space<vmem>>) attributes {dimension_semantics = [#tpu.dimension_semantics<parallel>], iteration_bounds = array<i64: 1>, scalar_prefetch = 1 : i64, scratch_operands = 1 : i64, tpu.core_type = #tpu.core_type<tc>, window_params = [{pipeline_mode = #tpu.pipeline_mode<synchronous>, transform_indices = @transform_0, window_bounds = array<i64: 16, 32>}, {pipeline_mode = #tpu.pipeline_mode<synchronous>, transform_indices = @transform_1, window_bounds = array<i64: 32, 32>}, {pipeline_mode = #tpu.pipeline_mode<synchronous>, transform_indices = @transform_2, window_bounds = array<i64: 1, 32>}, {pipeline_mode = #tpu.pipeline_mode<synchronous>, transform_indices = @transform_3, window_bounds = array<i64: 32, 32>}, {pipeline_mode = #tpu.pipeline_mode<synchronous>, transform_indices = @transform_4, window_bounds = array<i64: 1, 32>}, {pipeline_mode = #tpu.pipeline_mode<synchronous>, transform_indices = @transform_5, window_bounds = array<i64: 32, 128>}, {pipeline_mode = #tpu.pipeline_mode<synchronous>, transform_indices = @transform_6, window_bounds = array<i64: 1, 128>}, {transform_indices = @transform_7, window_bounds = array<i64: 8, 128>}]} {
    %c8_i32 = arith.constant 8 : i32
    %0 = arith.muli %arg0, %c8_i32 : i32
    %c0_i32 = arith.constant 0 : i32
    %c8_i32_0 = arith.constant 8 : i32
    %1 = arith.addi %c0_i32, %c8_i32_0 : i32
    %c1_i32 = arith.constant 1 : i32
    scf.for %arg11 = %c0_i32 to %1 step %c1_i32  : i32 {
      %c1_i32_21 = arith.constant 1 : i32
      %26 = arith.muli %arg11, %c1_i32_21 : i32
      %c0_i32_22 = arith.constant 0 : i32
      %27 = arith.addi %c0_i32_22, %26 : i32
      %28 = arith.addi %0, %27 : i32
      %29 = arith.index_cast %28 : i32 to index
      %30 = memref.load %arg1[%29] : memref<8xi32, #tpu.memory_space<smem>>
      %31 = arith.index_cast %30 : i32 to index
      %c0_23 = arith.constant 0 : index
      %32 = vector.load %arg2[%31, %c0_23] : memref<16x32xf32, #tpu.memory_space<vmem>>, vector<1x32xf32>
      %33 = arith.index_cast %27 : i32 to index
      %c0_24 = arith.constant 0 : index
      %34 = vector.load %arg10[%33, %c0_24] : memref<8x32xf32, #tpu.memory_space<vmem>>, vector<1x32xf32>
      tpu.vector_store %arg10[%33, %c0_24], %32 {strides = array<i32>} : memref<8x32xf32, #tpu.memory_space<vmem>>, vector<1x32xf32>,
    }
    %c8_i32_1 = arith.constant 8 : i32
    %c0 = arith.constant 0 : index
    %c0_2 = arith.constant 0 : index
    %2 = vector.load %arg10[%c0, %c0_2] : memref<8x32xf32, #tpu.memory_space<vmem>>, vector<8x32xf32>
    %3 = arith.truncf %2 : vector<8x32xf32> to vector<8x32xbf16>
    %c0_3 = arith.constant 0 : index
    %c0_4 = arith.constant 0 : index
    %4 = vector.load %arg3[%c0_3, %c0_4] : memref<32x32xbf16, #tpu.memory_space<vmem>>, vector<32x32xbf16>
    %cst = arith.constant dense<0.000000e+00> : vector<8x32xf32>
    %5 = tpu.matmul %3, %4, %cst {dimension_numbers = #tpu.dot_dimension_numbers<[1], [0], [0], [1], [0, 0, 1, 1], [], []>} : vector<8x32xbf16>, vector<32x32xbf16>, vector<8x32xf32> -> vector<8x32xf32>
    %c0_5 = arith.constant 0 : index
    %c0_6 = arith.constant 0 : index
    %6 = vector.load %arg4[%c0_5, %c0_6] : memref<1x32xf32, #tpu.memory_space<vmem>>, vector<1x32xf32>
    %7 = vector.broadcast %6 : vector<1x32xf32> to vector<8x32xf32>
    %8 = arith.addf %5, %7 : vector<8x32xf32>
    %cst_7 = arith.constant 0.000000e+00 : f32
    %9 = vector.broadcast %cst_7 : f32 to vector<8x32xf32>
    %10 = arith.maximumf %8, %9 : vector<8x32xf32>
    %11 = arith.truncf %10 : vector<8x32xf32> to vector<8x32xbf16>
    %c0_8 = arith.constant 0 : index
    %c0_9 = arith.constant 0 : index
    %12 = vector.load %arg5[%c0_8, %c0_9] : memref<32x32xbf16, #tpu.memory_space<vmem>>, vector<32x32xbf16>
    %cst_10 = arith.constant dense<0.000000e+00> : vector<8x32xf32>
    %13 = tpu.matmul %11, %12, %cst_10 {dimension_numbers = #tpu.dot_dimension_numbers<[1], [0], [0], [1], [0, 0, 1, 1], [], []>} : vector<8x32xbf16>, vector<32x32xbf16>, vector<8x32xf32> -> vector<8x32xf32>
    %c0_11 = arith.constant 0 : index
    %c0_12 = arith.constant 0 : index
    %14 = vector.load %arg6[%c0_11, %c0_12] : memref<1x32xf32, #tpu.memory_space<vmem>>, vector<1x32xf32>
    %15 = vector.broadcast %14 : vector<1x32xf32> to vector<8x32xf32>
    %16 = arith.addf %13, %15 : vector<8x32xf32>
    %cst_13 = arith.constant 0.000000e+00 : f32
    %17 = vector.broadcast %cst_13 : f32 to vector<8x32xf32>
    %18 = arith.maximumf %16, %17 : vector<8x32xf32>
    %19 = arith.truncf %18 : vector<8x32xf32> to vector<8x32xbf16>
    %c0_14 = arith.constant 0 : index
    %c0_15 = arith.constant 0 : index
    %20 = vector.load %arg7[%c0_14, %c0_15] : memref<32x128xbf16, #tpu.memory_space<vmem>>, vector<32x128xbf16>
    %cst_16 = arith.constant dense<0.000000e+00> : vector<8x128xf32>
    %21 = tpu.matmul %19, %20, %cst_16 {dimension_numbers = #tpu.dot_dimension_numbers<[1], [0], [0], [1], [0, 0, 1, 1], [], []>} : vector<8x32xbf16>, vector<32x128xbf16>, vector<8x128xf32> -> vector<8x128xf32>
    %c0_17 = arith.constant 0 : index
    %c0_18 = arith.constant 0 : index
    %22 = vector.load %arg8[%c0_17, %c0_18] : memref<1x128xf32, #tpu.memory_space<vmem>>, vector<1x128xf32>
    %23 = vector.broadcast %22 : vector<1x128xf32> to vector<8x128xf32>
    %24 = arith.addf %21, %23 : vector<8x128xf32>
    %c0_19 = arith.constant 0 : index
    %c0_20 = arith.constant 0 : index
    %25 = vector.load %arg9[%c0_19, %c0_20] : memref<8x128xf32, #tpu.memory_space<vmem>>, vector<8x128xf32>
    tpu.vector_store %arg9[%c0_19, %c0_20], %24 {strides = array<i32>} : memref<8x128xf32, #tpu.memory_space<vmem>>, vector<8x128xf32>,
    return
  }
  func.func @transform_0(%arg0: i32, %arg1: memref<8xi32, #tpu.memory_space<smem>>) -> (i32, i32) {
    %c0_i32 = arith.constant 0 : i32
    %c0_i32_0 = arith.constant 0 : i32
    %c0_i32_1 = arith.constant 0 : i32
    return %c0_i32, %c0_i32_0 : i32, i32
  }
  func.func @transform_1(%arg0: i32, %arg1: memref<8xi32, #tpu.memory_space<smem>>) -> (i32, i32) {
    %c0_i32 = arith.constant 0 : i32
    %c0_i32_0 = arith.constant 0 : i32
    %c0_i32_1 = arith.constant 0 : i32
    return %c0_i32, %c0_i32_0 : i32, i32
  }
  func.func @transform_2(%arg0: i32, %arg1: memref<8xi32, #tpu.memory_space<smem>>) -> (i32, i32) {
    %c0_i32 = arith.constant 0 : i32
    %c0_i32_0 = arith.constant 0 : i32
    %c0_i32_1 = arith.constant 0 : i32
    return %c0_i32, %c0_i32_0 : i32, i32
  }
  func.func @transform_3(%arg0: i32, %arg1: memref<8xi32, #tpu.memory_space<smem>>) -> (i32, i32) {
    %c0_i32 = arith.constant 0 : i32
    %c0_i32_0 = arith.constant 0 : i32
    %c0_i32_1 = arith.constant 0 : i32
    return %c0_i32, %c0_i32_0 : i32, i32
  }
  func.func @transform_4(%arg0: i32, %arg1: memref<8xi32, #tpu.memory_space<smem>>) -> (i32, i32) {
    %c0_i32 = arith.constant 0 : i32
    %c0_i32_0 = arith.constant 0 : i32
    %c0_i32_1 = arith.constant 0 : i32
    return %c0_i32, %c0_i32_0 : i32, i32
  }
  func.func @transform_5(%arg0: i32, %arg1: memref<8xi32, #tpu.memory_space<smem>>) -> (i32, i32) {
    %c0_i32 = arith.constant 0 : i32
    %c0_i32_0 = arith.constant 0 : i32
    %c0_i32_1 = arith.constant 0 : i32
    return %c0_i32, %c0_i32_0 : i32, i32
  }
  func.func @transform_6(%arg0: i32, %arg1: memref<8xi32, #tpu.memory_space<smem>>) -> (i32, i32) {
    %c0_i32 = arith.constant 0 : i32
    %c0_i32_0 = arith.constant 0 : i32
    %c0_i32_1 = arith.constant 0 : i32
    return %c0_i32, %c0_i32_0 : i32, i32
  }
  func.func @transform_7(%arg0: i32, %arg1: memref<8xi32, #tpu.memory_space<smem>>) -> (i32, i32) {
    %c0_i32 = arith.constant 0 : i32
    %c0_i32_0 = arith.constant 0 : i32
    return %arg0, %c0_i32 : i32, i32
  }
}

</mosaic_0001>

<llo_original>
// kernel: tpu_custom_call.1
$region0: #{tpu_custom_call.1}
  #allocation0 [shape = 'u32[]', space=smem, size = 0x4, offset = 0x4, fixed_abs, tag = 'smem constant byte address 0x4 - core index']
  #allocation1 [shape = 'u32[72,128]{1,0:T(1,128)}', space=vmem, size = 0x9000, scoped, tag = 'internal scratch']
  #allocation2 [shape = 'f32[8,32]{1,0:T(8,128)}', space=vmem, size = 0x1000, scoped, tag = 'scratch operand']
  #allocation3 [shape = 's32[1]{0}', space=sflag, size = 0x4, scoped, tag = 'scoped memory for tpu_custom_call.1']
  #allocation4 [shape = 'u8[512]{0}', space=smem, size = 0x200, scoped, tag = 'prefetched SMEM operand 0']
  %s0 = inlined_call_operand.hbm [shape: s32[8], index: 0, kind: input, shape index: {}]
  %s1 = inlined_call_operand.hbm [shape: f32[16,32], index: 1, kind: input, shape index: {}]
  %s2 = inlined_call_operand.hbm [shape: bf16[32,32], index: 2, kind: input, shape index: {}]
  %s3 = inlined_call_operand.vmem [shape: f32[1,32], index: 3, kind: input, shape index: {}]
  %s4 = inlined_call_operand.hbm [shape: bf16[32,32], index: 4, kind: input, shape index: {}]
  %s5 = inlined_call_operand.vmem [shape: f32[1,32], index: 5, kind: input, shape index: {}]
  %s6 = inlined_call_operand.hbm [shape: bf16[32,128], index: 6, kind: input, shape index: {}]
  %s7 = inlined_call_operand.vmem [shape: f32[1,128], index: 7, kind: input, shape index: {}]
  %s8 = inlined_call_operand.hbm [shape: f32[8,128], index: 8, kind: output, shape index: {}]
  %s9 = sld [smem:[#allocation0]]
  $region61: #{tpu_custom_call.1} parent=0
    _
  %s11 = ssub.s32 1, %s9
  %s12 = scalar_select 0, %s11, %s9
  %s14 = sshll.u32 %s0, 4
  %s15 = int_to_ptr.hbm [resolvable:$true] %s14
  %17 = dma.hbm_to_smem %s15, 16, [#allocation4], [#allocation3]
  %19 = dma.done [#allocation3], 16
  %20 = sfence
  $region1: #{tpu_custom_call.1} parent=0
    #allocation5 [shape = 'u8[8192]{0}', space=vmem, size = 0x2000, scoped, tag = 'input window, operand 1, single buffered']
    #allocation6 [shape = 's32[1]{0}', space=sflag, size = 0x4, scoped, tag = 'scoped memory for tpu_custom_call.1']
    #allocation7 [shape = 's32[1]{0}', space=sflag, size = 0x4, scoped, tag = 'scoped memory for tpu_custom_call.1']
    #allocation8 [shape = 'u8[8192]{0}', space=vmem, size = 0x2000, scoped, tag = 'input window, operand 2, single buffered']
    #allocation9 [shape = 's32[1]{0}', space=sflag, size = 0x4, scoped, tag = 'scoped memory for tpu_custom_call.1']
    #allocation10 [shape = 'u8[8192]{0}', space=vmem, size = 0x2000, scoped, tag = 'input window, operand 4, single buffered']
    #allocation11 [shape = 'u8[8192]{0}', space=vmem, size = 0x2000, scoped, tag = 'input window, operand 6, single buffered']
    #allocation12 [shape = 's32[1]{0}', space=sflag, size = 0x4, scoped, tag = 'scoped memory for tpu_custom_call.1']
    #allocation13 [shape = 'u8[4096]{0}', space=vmem, size = 0x1000, scoped, tag = 'output window, operand 0, single buffered']
    %21 = vsyncpa [#allocation6], 0
    %22 = vsyncpa [#allocation9], 0
    %23 = vsyncpa [#allocation12], 0
    %24 = vsyncpa [#allocation7], 0
    // Predicated region
    $region2: #{tpu_custom_call.1} parent=1 // pred_check
      _
    $region3: #{tpu_custom_call.1} parent=1 // pred_check_branch
      %26 = sbr.rel (0) target = $region5
    $region4: #{tpu_custom_call.1} parent=1 // pred_region
      %28 = vsyncadd [#allocation6], 0
      %s29 = sshll.u32 %s1, 4
      %s30 = int_to_ptr.hbm [resolvable:$true] %s29
      %s31 = sshll.u32 [#allocation5], 4
      %s32 = int_to_ptr.vmem [resolvable:$true] %s31
      %37 = dma.hbm_to_vmem [thread:$0]  %s30, 256, %s32, [#allocation6], 128, 128, 8
    $region5: #{tpu_custom_call.1} parent=1 // pred_fallthru
      _
    // Predicated region
    $region6: #{tpu_custom_call.1} parent=1 // pred_check
      _
    $region7: #{tpu_custom_call.1} parent=1 // pred_check_branch
      %39 = sbr.rel (0) target = $region9
    $region8: #{tpu_custom_call.1} parent=1 // pred_region
      %41 = vsyncadd [#allocation9], 0
      %s42 = sshll.u32 %s2, 4
      %s43 = int_to_ptr.hbm [resolvable:$true] %s42
      %s44 = sshll.u32 [#allocation8], 4
      %s45 = int_to_ptr.vmem [resolvable:$true] %s44
      %50 = dma.hbm_to_vmem [thread:$0]  %s43, 256, %s45, [#allocation9], 64, 64, 4
    $region9: #{tpu_custom_call.1} parent=1 // pred_fallthru
      _
    // Predicated region
    $region10: #{tpu_custom_call.1} parent=1 // pred_check
      _
    $region11: #{tpu_custom_call.1} parent=1 // pred_check_branch
      %52 = sbr.rel (0) target = $region13
    $region12: #{tpu_custom_call.1} parent=1 // pred_region
      _
    $region13: #{tpu_custom_call.1} parent=1 // pred_fallthru
      _
    // Predicated region
    $region14: #{tpu_custom_call.1} parent=1 // pred_check
      _
    $region15: #{tpu_custom_call.1} parent=1 // pred_check_branch
      %54 = sbr.rel (0) target = $region17
    $region16: #{tpu_custom_call.1} parent=1 // pred_region
      %56 = vsyncadd [#allocation9], 0
      %s57 = sshll.u32 %s4, 4
      %s58 = int_to_ptr.hbm [resolvable:$true] %s57
      %s59 = sshll.u32 [#allocation10], 4
      %s60 = int_to_ptr.vmem [resolvable:$true] %s59
      %65 = dma.hbm_to_vmem [thread:$0]  %s58, 256, %s60, [#allocation9], 64, 64, 4
    $region17: #{tpu_custom_call.1} parent=1 // pred_fallthru
      _
    // Predicated region
    $region18: #{tpu_custom_call.1} parent=1 // pred_check
      _
    $region19: #{tpu_custom_call.1} parent=1 // pred_check_branch
      %67 = sbr.rel (0) target = $region21
    $region20: #{tpu_custom_call.1} parent=1 // pred_region
      _
    $region21: #{tpu_custom_call.1} parent=1 // pred_fallthru
      _
    // Predicated region
    $region22: #{tpu_custom_call.1} parent=1 // pred_check
      _
    $region23: #{tpu_custom_call.1} parent=1 // pred_check_branch
      %69 = sbr.rel (0) target = $region25
    $region24: #{tpu_custom_call.1} parent=1 // pred_region
      %71 = vsyncadd [#allocation12], 0
      %s72 = sshll.u32 %s6, 4
      %s73 = int_to_ptr.hbm [resolvable:$true] %s72
      %s74 = sshll.u32 [#allocation11], 4
      %s75 = int_to_ptr.vmem [resolvable:$true] %s74
      %80 = dma.hbm_to_vmem [thread:$0]  %s73, 256, %s75, [#allocation12], 64, 64, 4
    $region25: #{tpu_custom_call.1} parent=1 // pred_fallthru
      _
    // Predicated region
    $region26: #{tpu_custom_call.1} parent=1 // pred_check
      _
    $region27: #{tpu_custom_call.1} parent=1 // pred_check_branch
      %82 = sbr.rel (0) target = $region29
    $region28: #{tpu_custom_call.1} parent=1 // pred_region
      _
    $region29: #{tpu_custom_call.1} parent=1 // pred_fallthru
      _
    // Predicated region
    $region30: #{tpu_custom_call.1} parent=1 // pred_check
      _
    $region31: #{tpu_custom_call.1} parent=1 // pred_check_branch
      %84 = sbr.rel (0) target = $region33
    $region32: #{tpu_custom_call.1} parent=1 // pred_region
      %86 = dma.done [#allocation6], 256
    $region33: #{tpu_custom_call.1} parent=1 // pred_fallthru
      _
    // Predicated region
    $region34: #{tpu_custom_call.1} parent=1 // pred_check
      _
    $region35: #{tpu_custom_call.1} parent=1 // pred_check_branch
      %88 = sbr.rel (0) target = $region37
    $region36: #{tpu_custom_call.1} parent=1 // pred_region
      %90 = dma.done [#allocation9], 256
    $region37: #{tpu_custom_call.1} parent=1 // pred_fallthru
      _
    // Predicated region
    $region38: #{tpu_custom_call.1} parent=1 // pred_check
      _
    $region39: #{tpu_custom_call.1} parent=1 // pred_check_branch
      %92 = sbr.rel (0) target = $region41
    $region40: #{tpu_custom_call.1} parent=1 // pred_region
      %94 = dma.done [#allocation9], 256
    $region41: #{tpu_custom_call.1} parent=1 // pred_fallthru
      _
    // Predicated region
    $region42: #{tpu_custom_call.1} parent=1 // pred_check
      _
    $region43: #{tpu_custom_call.1} parent=1 // pred_check_branch
      %96 = sbr.rel (0) target = $region45
    $region44: #{tpu_custom_call.1} parent=1 // pred_region
      %98 = dma.done [#allocation12], 256
    $region45: #{tpu_custom_call.1} parent=1 // pred_fallthru
      _
    %s100 = smul.u32 0, 8
    loop: start=0, step=1, limit=8
    $region46: #{tpu_custom_call.1} parent=1 // loop_pre_header
      _
    $region47: #{tpu_custom_call.1} parent=1 // loop_header
      %s102 = sphi 0, %s106
      %p103 = scmp.ge.s32.totalorder %s102, 8
    $region48: #{tpu_custom_call.1} parent=1 // loop_header_branch
      %105 = sbr.rel (%p103) target = $region52
    $region49: #{tpu_custom_call.1} parent=1 // loop_body
      %s107 = sadd.s32 %s100, %s102
      %s108 = sld [smem:[#allocation4 + %s107]]
      %s109 = scalar_lea.vmem [#allocation5], %s108
      %v110 = vld [vmem:[%s109] sm:$0x1]
      %s111 = scalar_lea.vmem [#allocation2], %s102
      %vm112 = vcmask 253952
      %113 = vst.msk [vmem:[%s111] sm:$0x1] %vm112, %v110
    $region50: #{tpu_custom_call.1} parent=1 // loop_footer
      %s106 = sadd.s32 1, %s102
    $region51: #{tpu_custom_call.1} parent=1 // loop_footer_branch
      %101 = sbr.rel target = $region47
    $region52: #{tpu_custom_call.1} parent=1 // loop_exit
      _
    %v114 = vld [vmem:[#allocation2] sm:$0xff]
    %v115 = vpack.c.bf16 %v114, %v114
    %v116 = vld [vmem:[#allocation8] sm:$0xf]
    %v117 = vld [vmem:[#allocation8 + $0x4] sm:$0xf]
    %v118 = vld [vmem:[#allocation8 + $0x8] sm:$0xf]
    %v119 = vld [vmem:[#allocation8 + $0xc] sm:$0xf]
    %v120 = vld [vmem:[%s3] sm:$0x1]
    %v122 = vperm.slane %v120, 0
    %v128 = vunpack.c.l.b16 %v116
    %v129 = vunpack.c.l.b16 %v117
    %v130 = vunpack.c.l.b16 %v118
    %v131 = vunpack.c.l.b16 %v119
    %v132 = vpack.c.b16 %v129, %v128
    %v133 = vpack.c.b16 %v131, %v130
    %vm136 = vcmask 261120
    %v138 = vsel %vm136, %v115, 0
    %140 = vmatpush.bf16.msra.mxu0 0
    %141 = vmatpush.bf16.msra.mxu0 0
    %142 = vmatpush.bf16.msra.mxu0 0
    %143 = vmatpush.bf16.msra.mxu0 0
    %144 = vmatpush.bf16.msra.mxu0 0
    %145 = vmatpush.bf16.msra.mxu0 0
    %146 = vmatpush.bf16.msra.mxu0 %v133
    %147 = vmatpush.bf16.msra.mxu0 %v132
    %148 = vmatmul.bf16.gmra.mxu0 %v138
    %v149 = vpop.f32.mrf.mxu0
    %v150 = vadd.f32 %v122, %v149
    %v151 = vpop.f32.mrf.mxu0
    %152 = vdwg.mxu0
    %v153 = vmax.f32 %v150, 0.0
    %v154 = vpack.c.bf16 %v153, %v153
    %v155 = vld [vmem:[#allocation10] sm:$0xf]
    %v156 = vld [vmem:[#allocation10 + $0x4] sm:$0xf]
    %v157 = vld [vmem:[#allocation10 + $0x8] sm:$0xf]
    %v158 = vld [vmem:[#allocation10 + $0xc] sm:$0xf]
    %v159 = vld [vmem:[%s5] sm:$0x1]
    %v161 = vperm.slane %v159, 0
    %v167 = vunpack.c.l.b16 %v155
    %v168 = vunpack.c.l.b16 %v156
    %v169 = vunpack.c.l.b16 %v157
    %v170 = vunpack.c.l.b16 %v158
    %v171 = vpack.c.b16 %v168, %v167
    %v172 = vpack.c.b16 %v170, %v169
    %v176 = vsel %vm136, %v154, 0
    %178 = vmatpush.bf16.msra.mxu0 0
    %179 = vmatpush.bf16.msra.mxu0 0
    %180 = vmatpush.bf16.msra.mxu0 0
    %181 = vmatpush.bf16.msra.mxu0 0
    %182 = vmatpush.bf16.msra.mxu0 0
    %183 = vmatpush.bf16.msra.mxu0 0
    %184 = vmatpush.bf16.msra.mxu0 %v172
    %185 = vmatpush.bf16.msra.mxu0 %v171
    %186 = vmatmul.bf16.gmra.mxu0 %v176
    %v187 = vpop.f32.mrf.mxu0
    %v188 = vadd.f32 %v161, %v187
    %v189 = vpop.f32.mrf.mxu0
    %190 = vdwg.mxu0
    %v191 = vmax.f32 %v188, 0.0
    %v192 = vpack.c.bf16 %v191, %v191
    %v193 = vld [vmem:[#allocation11] sm:$0xf]
    %v194 = vld [vmem:[#allocation11 + $0x4] sm:$0xf]
    %v195 = vld [vmem:[#allocation11 + $0x8] sm:$0xf]
    %v196 = vld [vmem:[#allocation11 + $0xc] sm:$0xf]
    %v197 = vld [vmem:[%s7] sm:$0x1]
    %v199 = vperm.slane %v197, 0
    %v205 = vunpack.c.l.b16 %v193
    %v206 = vunpack.c.l.b16 %v194
    %v207 = vunpack.c.l.b16 %v195
    %v208 = vunpack.c.l.b16 %v196
    %v209 = vpack.c.b16 %v206, %v205
    %v210 = vpack.c.b16 %v208, %v207
    %v214 = vsel %vm136, %v192, 0
    %216 = vmatpush.bf16.msra.mxu0 0
    %217 = vmatpush.bf16.msra.mxu0 0
    %218 = vmatpush.bf16.msra.mxu0 0
    %219 = vmatpush.bf16.msra.mxu0 0
    %220 = vmatpush.bf16.msra.mxu0 0
    %221 = vmatpush.bf16.msra.mxu0 0
    %222 = vmatpush.bf16.msra.mxu0 %v210
    %223 = vmatpush.bf16.msra.mxu0 %v209
    %224 = vmatmul.bf16.gmra.mxu0 %v214
    %v225 = vpop.f32.mrf.mxu0
    %v226 = vadd.f32 %v199, %v225
    %v227 = vpop.f32.mrf.mxu0
    %228 = vdwg.mxu0
    %229 = vst [vmem:[#allocation13] sm:$0xff] %v226
    // Predicated region
    $region53: #{tpu_custom_call.1} parent=1 // pred_check
      _
    $region54: #{tpu_custom_call.1} parent=1 // pred_check_branch
      %231 = sbr.rel (0) target = $region56
    $region55: #{tpu_custom_call.1} parent=1 // pred_region
      %233 = vsyncadd [#allocation7], 0
      %s235 = sshll.u32 [#allocation13], 4
      %s236 = int_to_ptr.vmem [resolvable:$true] %s235
      %s237 = sshll.u32 %s8, 4
      %s238 = int_to_ptr.hbm [resolvable:$true] %s237
      %240 = dma.vmem_to_hbm [thread:$0]  %s236, 128, %s238, [#allocation7]
    $region56: #{tpu_custom_call.1} parent=1 // pred_fallthru
      _
    // Predicated region
    $region57: #{tpu_custom_call.1} parent=1 // pred_check
      _
    $region58: #{tpu_custom_call.1} parent=1 // pred_check_branch
      %242 = sbr.rel (0) target = $region60
    $region59: #{tpu_custom_call.1} parent=1 // pred_region
      %244 = dma.done [#allocation7], 128
    $region60: #{tpu_custom_call.1} parent=1 // pred_fallthru
      _
    %245 = vsyncpa [#allocation6], 1
    %246 = vsyncpa [#allocation9], 1
    %247 = vsyncpa [#allocation12], 1
    %248 = vsyncpa [#allocation7], 1

</llo_original>
